<compile_context>
chip_gen: v6e
topology: v6e:2x2x1
jax: 0.10.0
libtpu: 0.0.40
codegen_flags: <defaults>
</compile_context>

<pallas_src>
import functools

import jax
import jax.numpy as jnp
from jax.experimental import pallas as pl
from jax.experimental.pallas import tpu as pltpu


def _round_up(x: int, m: int) -> int:
    return ((x + m - 1) // m) * m


def _actor_kernel(x_ref, w1_ref, b1_ref, w2_ref, b2_ref, o_ref):
    """Fused fc1 -> ReLU -> fc2 -> tanh on one tile of the batch (all f32)."""
    h = jnp.dot(x_ref[...], w1_ref[...], preferred_element_type=jnp.float32)
    h = jnp.maximum(h + b1_ref[...], 0.0)
    y = jnp.dot(h, w2_ref[...], preferred_element_type=jnp.float32)
    o_ref[...] = jnp.tanh(y + b2_ref[...]).astype(o_ref.dtype)


def prepare_actor_params(w1, b1, w2, b2):
    """One-time parameter prep, hoisted out of the per-call path.

    Returns (w1, b1[1,H], w2, b2[1,A]) all float32."""
    S, H = w1.shape
    A = w2.shape[1]
    return (w1.astype(jnp.float32),
            b1.reshape(1, H).astype(jnp.float32),
            w2.astype(jnp.float32),
            b2.reshape(1, A).astype(jnp.float32))


@jax.jit
def _actor_forward_small(state, w1, b1r, w2, b2r):
    """Latency path (small batch): full-array BlockSpecs, no grid, no padding."""
    B, S = state.shape
    H = w1.shape[1]
    A = w2.shape[1]
    full = lambda shape: pl.BlockSpec(shape, lambda: (0,) * len(shape))
    return pl.pallas_call(
        _actor_kernel,
        out_shape=jax.ShapeDtypeStruct((B, A), jnp.float32),
        grid=(),
        in_specs=[
            full((B, S)),
            full((S, H)),
            full((1, H)),
            full((H, A)),
            full((1, A)),
        ],
        out_specs=full((B, A)),
    )(state, w1, b1r, w2, b2r)


@functools.partial(jax.jit, static_argnames=("block_b",))
def _actor_forward_tiled(state, w1, b1r, w2, b2r, *, block_b):
    """Batch-tiled path (B % block_b == 0, block_b % 8 == 0).

    The batch axis is a "parallel" grid dimension (shards across v7x's two
    TensorCores and pipelines the state DMA); weights/biases map to block
    (0, 0) every step so they stay resident in VMEM.  Output is written
    directly as [B, A] (lane-thin but full-width, so the writeback stays a
    contiguous DMA with no wasted bytes)."""
    B, S = state.shape
    H = w1.shape[1]
    A = w2.shape[1]
    return pl.pallas_call(
        _actor_kernel,
        out_shape=jax.ShapeDtypeStruct((B, A), jnp.float32),
        grid=(B // block_b,),
        in_specs=[
            pl.BlockSpec((block_b, S), lambda i: (i, 0)),
            pl.BlockSpec((S, H), lambda i: (0, 0)),
            pl.BlockSpec((1, H), lambda i: (0, 0)),
            pl.BlockSpec((H, A), lambda i: (0, 0)),
            pl.BlockSpec((1, A), lambda i: (0, 0)),
        ],
        out_specs=pl.BlockSpec((block_b, A), lambda i: (i, 0)),
        compiler_params=pltpu.CompilerParams(
            dimension_semantics=("parallel",)),
    )(state, w1, b1r, w2, b2r)


def _choose_block_b(B: int):
    """Pick a batch tile: large tiles (amortize ~0.35 us/step overhead) while
    keeping >=4 grid steps so both v7x TensorCores get >=2 pipelined steps."""
    if B <= 8:
        return None  # latency path
    for cand in (1024, 512, 256, 128, 64, 32, 16, 8):
        if B // cand >= 4:
            return cand
    return 8


def actor_forward(state, params, block_b=None):
    """Actor forward.  `params` from prepare_actor_params().

    Dispatches between the single-shot latency path and the batch-tiled path;
    ragged batch sizes are padded once here (rows only) rather than asserting."""
    w1, b1r, w2, b2r = params
    B = state.shape[0]
    if block_b is None:
        block_b = _choose_block_b(B)
    if block_b is None or B < 2 * block_b:
        return _actor_forward_small(state, w1, b1r, w2, b2r)
    Bp = _round_up(B, block_b)
    if Bp != B:
        state_p = jnp.zeros((Bp, state.shape[1]), state.dtype).at[:B].set(state)
        out = _actor_forward_tiled(state_p, w1, b1r, w2, b2r, block_b=block_b)
        return out[:B]
    return _actor_forward_tiled(state, w1, b1r, w2, b2r, block_b=block_b)


def init_actor_params(key, state_size, action_size, fc_units):
    """Deterministic init mirroring the PyTorch module's reset_parameters().

    NOTE: the original code uses fan_in = weight.size()[0] == out_features
    (fc_units) for the fc1 limit; we replicate that exactly.  Biases keep the
    default nn.Linear init U(-1/sqrt(in_features), 1/sqrt(in_features))."""
    k1, k2, k3, k4 = jax.random.split(key, 4)
    lim1 = 1.0 / jnp.sqrt(jnp.float32(fc_units))          # as in hidden_init()
    w1 = jax.random.uniform(k1, (state_size, fc_units), jnp.float32,
                            minval=-lim1, maxval=lim1)
    blim1 = 1.0 / jnp.sqrt(jnp.float32(state_size))
    b1 = jax.random.uniform(k2, (fc_units,), jnp.float32,
                            minval=-blim1, maxval=blim1)
    w2 = jax.random.uniform(k3, (fc_units, action_size), jnp.float32,
                            minval=-0.003, maxval=0.003)
    blim2 = 1.0 / jnp.sqrt(jnp.float32(fc_units))
    b2 = jax.random.uniform(k4, (action_size,), jnp.float32,
                            minval=-blim2, maxval=blim2)
    return w1, b1, w2, b2


if __name__ == "__main__":
    # Small shapes consistent with the module (Reacher-like): state=33, action=4.
    batch, state_size, action_size, fc_units = 2, 33, 4, 64

    key = jax.random.PRNGKey(0)
    k_params, k_state, k_big = jax.random.split(key, 3)
    w1, b1, w2, b2 = init_actor_params(k_params, state_size, action_size, fc_units)
    params = prepare_actor_params(w1, b1, w2, b2)

    def ref_forward(x):
        return jnp.tanh(jnp.maximum(x @ w1 + b1, 0.0) @ w2 + b2)

    # --- small-batch latency path: one fused kernel, no padding -------------
    state = jax.random.normal(k_state, (batch, state_size), jnp.float32)
    out = jax.block_until_ready(actor_forward(state, params))
    assert out.shape == (batch, action_size)
    assert jnp.allclose(out, ref_forward(state), atol=1e-5, rtol=1e-5)

    # --- batch-tiled path: 2048 rows -> 4 grid steps at block_b=512 ---------
    big_batch = 2048
    big_state = jax.random.normal(k_big, (big_batch, state_size), jnp.float32)
    out_big = jax.block_until_ready(actor_forward(big_state, params))
    assert out_big.shape == (big_batch, action_size)
    assert jnp.allclose(out_big, ref_forward(big_state), atol=1e-5, rtol=1e-5)

    # --- ragged batch: padded once in the wrapper, same kernel --------------
    ragged = 600
    rag_state = big_state[:ragged]
    out_rag = jax.block_until_ready(actor_forward(rag_state, params))
    assert out_rag.shape == (ragged, action_size)
    assert jnp.allclose(out_rag, ref_forward(rag_state), atol=1e-5, rtol=1e-5)

    print("KERNEL_OK")
</pallas_src>

<mosaic_0001>
module attributes {stable_mosaic.version = 11 : i64} {
  func.func @_actor_kernel(%arg0: memref<2x33xf32, #tpu.memory_space<vmem>>, %arg1: memref<33x64xf32, #tpu.memory_space<vmem>>, %arg2: memref<1x64xf32, #tpu.memory_space<vmem>>, %arg3: memref<64x4xf32, #tpu.memory_space<vmem>>, %arg4: memref<1x4xf32, #tpu.memory_space<vmem>>, %arg5: memref<2x4xf32, #tpu.memory_space<vmem>>) attributes {dimension_semantics = [], scalar_prefetch = 0 : i64, scratch_operands = 0 : i64, tpu.core_type = #tpu.core_type<tc>} {
    %c0 = arith.constant 0 : index
    %c0_0 = arith.constant 0 : index
    %0 = vector.load %arg0[%c0, %c0_0] : memref<2x33xf32, #tpu.memory_space<vmem>>, vector<2x33xf32>
    %c0_1 = arith.constant 0 : index
    %c0_2 = arith.constant 0 : index
    %1 = vector.load %arg1[%c0_1, %c0_2] : memref<33x64xf32, #tpu.memory_space<vmem>>, vector<33x64xf32>
    %cst = arith.constant dense<0.000000e+00> : vector<2x64xf32>
    %2 = tpu.matmul %0, %1, %cst {dimension_numbers = #tpu.dot_dimension_numbers<[1], [0], [0], [1], [0, 0, 1, 1], [], []>} : vector<2x33xf32>, vector<33x64xf32>, vector<2x64xf32> -> vector<2x64xf32>
    %c0_3 = arith.constant 0 : index
    %c0_4 = arith.constant 0 : index
    %3 = vector.load %arg2[%c0_3, %c0_4] : memref<1x64xf32, #tpu.memory_space<vmem>>, vector<1x64xf32>
    %4 = vector.broadcast %3 : vector<1x64xf32> to vector<2x64xf32>
    %5 = arith.addf %2, %4 : vector<2x64xf32>
    %cst_5 = arith.constant 0.000000e+00 : f32
    %6 = vector.broadcast %cst_5 : f32 to vector<2x64xf32>
    %7 = arith.maximumf %5, %6 : vector<2x64xf32>
    %c0_6 = arith.constant 0 : index
    %c0_7 = arith.constant 0 : index
    %8 = vector.load %arg3[%c0_6, %c0_7] : memref<64x4xf32, #tpu.memory_space<vmem>>, vector<64x4xf32>
    %cst_8 = arith.constant dense<0.000000e+00> : vector<2x4xf32>
    %9 = tpu.matmul %7, %8, %cst_8 {dimension_numbers = #tpu.dot_dimension_numbers<[1], [0], [0], [1], [0, 0, 1, 1], [], []>} : vector<2x64xf32>, vector<64x4xf32>, vector<2x4xf32> -> vector<2x4xf32>
    %c0_9 = arith.constant 0 : index
    %c0_10 = arith.constant 0 : index
    %10 = vector.load %arg4[%c0_9, %c0_10] : memref<1x4xf32, #tpu.memory_space<vmem>>, vector<1x4xf32>
    %11 = vector.broadcast %10 : vector<1x4xf32> to vector<2x4xf32>
    %12 = arith.addf %9, %11 : vector<2x4xf32>
    %13 = math.tanh %12 : vector<2x4xf32>
    %c0_11 = arith.constant 0 : index
    %c0_12 = arith.constant 0 : index
    %14 = vector.load %arg5[%c0_11, %c0_12] : memref<2x4xf32, #tpu.memory_space<vmem>>, vector<2x4xf32>
    tpu.vector_store %arg5[%c0_11, %c0_12], %13 {strides = array<i32>} : memref<2x4xf32, #tpu.memory_space<vmem>>, vector<2x4xf32>,
    return
  }
}

</mosaic_0001>

<llo_original>
// kernel: _actor_forward_small.1
$region0: #{_actor_forward_small.1}
  #allocation0 [shape = 'u32[]', space=smem, size = 0x4, offset = 0x4, fixed_abs, tag = 'smem constant byte address 0x4 - core index']
  #allocation1 [shape = 'u32[144,128]{1,0:T(1,128)}', space=vmem, size = 0x12000, scoped, tag = 'internal scratch']
  %s0 = inlined_call_operand.vmem [shape: f32[2,33], index: 0, kind: input, shape index: {}]
  %s1 = inlined_call_operand.vmem [shape: f32[33,64], index: 1, kind: input, shape index: {}]
  %s2 = inlined_call_operand.vmem [shape: f32[1,64], index: 2, kind: input, shape index: {}]
  %s3 = inlined_call_operand.vmem [shape: f32[64,4], index: 3, kind: input, shape index: {}]
  %s4 = inlined_call_operand.vmem [shape: f32[1,4], index: 4, kind: input, shape index: {}]
  %s5 = inlined_call_operand.hbm [shape: f32[2,4], index: 5, kind: output, shape index: {}]
  %s6 = sld [smem:[#allocation0]]
  $region30: #{_actor_forward_small.1} parent=0
    _
  %s8 = ssub.s32 1, %s6
  %s9 = scalar_select 0, %s8, %s6
  $region1: #{_actor_forward_small.1} parent=0
    #allocation2 [shape = 'u8[1024]{0}', space=vmem, size = 0x400, scoped, tag = 'output window, operand 0, single buffered']
    #allocation3 [shape = 's32[1]{0}', space=sflag, size = 0x4, scoped, tag = 'scoped memory for _actor_forward_small.1']
    %10 = vsyncpa [#allocation3], 0
    // Predicated region
    $region2: #{_actor_forward_small.1} parent=1 // pred_check
      _
    $region3: #{_actor_forward_small.1} parent=1 // pred_check_branch
      %12 = sbr.rel (0) target = $region5
    $region4: #{_actor_forward_small.1} parent=1 // pred_region
      _
    $region5: #{_actor_forward_small.1} parent=1 // pred_fallthru
      _
    // Predicated region
    $region6: #{_actor_forward_small.1} parent=1 // pred_check
      _
    $region7: #{_actor_forward_small.1} parent=1 // pred_check_branch
      %14 = sbr.rel (0) target = $region9
    $region8: #{_actor_forward_small.1} parent=1 // pred_region
      _
    $region9: #{_actor_forward_small.1} parent=1 // pred_fallthru
      _
    // Predicated region
    $region10: #{_actor_forward_small.1} parent=1 // pred_check
      _
    $region11: #{_actor_forward_small.1} parent=1 // pred_check_branch
      %16 = sbr.rel (0) target = $region13
    $region12: #{_actor_forward_small.1} parent=1 // pred_region
      _
    $region13: #{_actor_forward_small.1} parent=1 // pred_fallthru
      _
    // Predicated region
    $region14: #{_actor_forward_small.1} parent=1 // pred_check
      _
    $region15: #{_actor_forward_small.1} parent=1 // pred_check_branch
      %18 = sbr.rel (0) target = $region17
    $region16: #{_actor_forward_small.1} parent=1 // pred_region
      _
    $region17: #{_actor_forward_small.1} parent=1 // pred_fallthru
      _
    // Predicated region
    $region18: #{_actor_forward_small.1} parent=1 // pred_check
      _
    $region19: #{_actor_forward_small.1} parent=1 // pred_check_branch
      %20 = sbr.rel (0) target = $region21
    $region20: #{_actor_forward_small.1} parent=1 // pred_region
      _
    $region21: #{_actor_forward_small.1} parent=1 // pred_fallthru
      _
    %v21 = vld [vmem:[%s0] sm:$0x3]
    %v22 = vld [vmem:[%s1] sm:$0xff]
    %v23 = vld [vmem:[%s1 + $0x8] sm:$0xff]
    %v24 = vld [vmem:[%s1 + $0x10] sm:$0xff]
    %v25 = vld [vmem:[%s1 + $0x18] sm:$0xff]
    %v26 = vld [vmem:[%s1 + $0x20] sm:$0x1]
    %v27 = vld [vmem:[%s2] sm:$0x1]
    %v29 = vlaneseq
    %v30 = vshrl.u32 %v29, 7
    %v31 = vsub.s32 0, %v30
    %v32 = vrot.slane %v27, %v31
    %vm34 = vcmask 269312
    %v36 = vsel %vm34, %v21, 0
    %vm38 = vcmask 1040384
    %v40 = vsel %vm38, %v26, 0
    %42 = vmatprep.subr.mxu0 0.0
    %43 = vmatpush1.msra.mxu0 0.0
    %44 = vmatprep.subr.mxu0 0.0
    %45 = vmatpush1.msra.mxu0 0.0
    %46 = vmatprep.subr.mxu0 0.0
    %47 = vmatpush1.msra.mxu0 0.0
    %48 = vmatprep.subr.mxu0 0.0
    %49 = vmatpush1.msra.mxu0 0.0
    %50 = vmatprep.subr.mxu0 0.0
    %51 = vmatpush1.msra.mxu0 0.0
    %52 = vmatprep.subr.mxu0 0.0
    %53 = vmatpush1.msra.mxu0 0.0
    %54 = vmatprep.subr.mxu0 0.0
    %55 = vmatpush1.msra.mxu0 0.0
    %56 = vmatprep.subr.mxu0 0.0
    %57 = vmatpush1.msra.mxu0 0.0
    %58 = vmatprep.subr.mxu0 0.0
    %59 = vmatpush1.msra.mxu0 0.0
    %60 = vmatprep.subr.mxu0 0.0
    %61 = vmatpush1.msra.mxu0 0.0
    %62 = vmatprep.subr.mxu0 0.0
    %63 = vmatpush1.msra.mxu0 0.0
    %64 = vmatprep.subr.mxu0 0.0
    %65 = vmatpush1.msra.mxu0 %v40
    %66 = vmatprep.subr.mxu0 0.0
    %67 = vmatpush1.msra.mxu0 %v25
    %68 = vmatprep.subr.mxu0 0.0
    %69 = vmatpush1.msra.mxu0 %v24
    %70 = vmatprep.subr.mxu0 0.0
    %71 = vmatpush1.msra.mxu0 %v23
    %72 = vmatprep.subr.mxu0 0.0
    %73 = vmatpush1.msra.mxu0 %v22
    %74 = vmatprep.subr.mxu0 0.0
    %75 = vmatpush2.msra.mxu0 0.0
    %76 = vmatprep.subr.mxu0 0.0
    %77 = vmatpush2.msra.mxu0 0.0
    %78 = vmatprep.subr.mxu0 0.0
    %79 = vmatpush2.msra.mxu0 0.0
    %80 = vmatprep.subr.mxu0 0.0
    %81 = vmatpush2.msra.mxu0 0.0
    %82 = vmatprep.subr.mxu0 0.0
    %83 = vmatpush2.msra.mxu0 0.0
    %84 = vmatprep.subr.mxu0 0.0
    %85 = vmatpush2.msra.mxu0 0.0
    %86 = vmatprep.subr.mxu0 0.0
    %87 = vmatpush2.msra.mxu0 0.0
    %88 = vmatprep.subr.mxu0 0.0
    %89 = vmatpush2.msra.mxu0 0.0
    %90 = vmatprep.subr.mxu0 0.0
    %91 = vmatpush2.msra.mxu0 0.0
    %92 = vmatprep.subr.mxu0 0.0
    %93 = vmatpush2.msra.mxu0 0.0
    %94 = vmatprep.subr.mxu0 0.0
    %95 = vmatpush2.msra.mxu0 0.0
    %96 = vmatprep.subr.mxu0 0.0
    %97 = vmatpush2.msra.mxu0 0.0
    %98 = vmatprep.subr.mxu0 0.0
    %99 = vmatpush2.msra.mxu0 0.0
    %100 = vmatprep.subr.mxu0 0.0
    %101 = vmatpush2.msra.mxu0 0.0
    %102 = vmatprep.subr.mxu0 0.0
    %103 = vmatpush2.msra.mxu0 0.0
    %104 = vmatprep.subr.mxu0 0.0
    %105 = vmatpush2.msra.mxu0 0.0
    %106 = vmatprep.mubr.f32.mxu0 0.0
    %107 = vmatmul.mubr.f32.gmra.mxu0 %v36
    %v108 = vpop.f32.mrf.mxu0
    %v109 = vadd.f32 %v32, %v108
    %v110 = vpop.f32.mrf.mxu0
    %111 = vdwg.mxu0
    %v112 = vmax.f32 %v109, 0.0
    %v113 = vld [vmem:[%s3] sm:$0xff]
    %v114 = vld [vmem:[%s3 + $0x8] sm:$0xff]
    %v115 = vld [vmem:[%s3 + $0x10] sm:$0xff]
    %v116 = vld [vmem:[%s3 + $0x18] sm:$0xff]
    %v117 = vld [vmem:[%s3 + $0x20] sm:$0xff]
    %v118 = vld [vmem:[%s3 + $0x28] sm:$0xff]
    %v119 = vld [vmem:[%s3 + $0x30] sm:$0xff]
    %v120 = vld [vmem:[%s3 + $0x38] sm:$0xff]
    %v121 = vld [vmem:[%s4] sm:$0x1]
    %v123 = vlaneseq
    %v124 = vshrl.u32 %v123, 7
    %v125 = vsub.s32 0, %v124
    %v126 = vrot.slane %v121, %v125
    %vm128 = vcmask 523264
    %v130 = vsel %vm128, %v112, 0
    %132 = vmatprep.subr.mxu0 0.0
    %133 = vmatpush1.msra.mxu0 0.0
    %134 = vmatprep.subr.mxu0 0.0
    %135 = vmatpush1.msra.mxu0 0.0
    %136 = vmatprep.subr.mxu0 0.0
    %137 = vmatpush1.msra.mxu0 0.0
    %138 = vmatprep.subr.mxu0 0.0
    %139 = vmatpush1.msra.mxu0 0.0
    %140 = vmatprep.subr.mxu0 0.0
    %141 = vmatpush1.msra.mxu0 0.0
    %142 = vmatprep.subr.mxu0 0.0
    %143 = vmatpush1.msra.mxu0 0.0
    %144 = vmatprep.subr.mxu0 0.0
    %145 = vmatpush1.msra.mxu0 0.0
    %146 = vmatprep.subr.mxu0 0.0
    %147 = vmatpush1.msra.mxu0 0.0
    %148 = vmatprep.subr.mxu0 0.0
    %149 = vmatpush1.msra.mxu0 %v120
    %150 = vmatprep.subr.mxu0 0.0
    %151 = vmatpush1.msra.mxu0 %v119
    %152 = vmatprep.subr.mxu0 0.0
    %153 = vmatpush1.msra.mxu0 %v118
    %154 = vmatprep.subr.mxu0 0.0
    %155 = vmatpush1.msra.mxu0 %v117
    %156 = vmatprep.subr.mxu0 0.0
    %157 = vmatpush1.msra.mxu0 %v116
    %158 = vmatprep.subr.mxu0 0.0
    %159 = vmatpush1.msra.mxu0 %v115
    %160 = vmatprep.subr.mxu0 0.0
    %161 = vmatpush1.msra.mxu0 %v114
    %162 = vmatprep.subr.mxu0 0.0
    %163 = vmatpush1.msra.mxu0 %v113
    %164 = vmatprep.subr.mxu0 0.0
    %165 = vmatpush2.msra.mxu0 0.0
    %166 = vmatprep.subr.mxu0 0.0
    %167 = vmatpush2.msra.mxu0 0.0
    %168 = vmatprep.subr.mxu0 0.0
    %169 = vmatpush2.msra.mxu0 0.0
    %170 = vmatprep.subr.mxu0 0.0
    %171 = vmatpush2.msra.mxu0 0.0
    %172 = vmatprep.subr.mxu0 0.0
    %173 = vmatpush2.msra.mxu0 0.0
    %174 = vmatprep.subr.mxu0 0.0
    %175 = vmatpush2.msra.mxu0 0.0
    %176 = vmatprep.subr.mxu0 0.0
    %177 = vmatpush2.msra.mxu0 0.0
    %178 = vmatprep.subr.mxu0 0.0
    %179 = vmatpush2.msra.mxu0 0.0
    %180 = vmatprep.subr.mxu0 0.0
    %181 = vmatpush2.msra.mxu0 0.0
    %182 = vmatprep.subr.mxu0 0.0
    %183 = vmatpush2.msra.mxu0 0.0
    %184 = vmatprep.subr.mxu0 0.0
    %185 = vmatpush2.msra.mxu0 0.0
    %186 = vmatprep.subr.mxu0 0.0
    %187 = vmatpush2.msra.mxu0 0.0
    %188 = vmatprep.subr.mxu0 0.0
    %189 = vmatpush2.msra.mxu0 0.0
    %190 = vmatprep.subr.mxu0 0.0
    %191 = vmatpush2.msra.mxu0 0.0
    %192 = vmatprep.subr.mxu0 0.0
    %193 = vmatpush2.msra.mxu0 0.0
    %194 = vmatprep.subr.mxu0 0.0
    %195 = vmatpush2.msra.mxu0 0.0
    %196 = vmatprep.mubr.f32.mxu0 0.0
    %197 = vmatmul.mubr.f32.gmra.mxu0 %v130
    %v198 = vpop.f32.mrf.mxu0
    %v199 = vadd.f32 %v126, %v198
    %v200 = vpop.f32.mrf.mxu0
    %201 = vdwg.mxu0
    %v202 = vtanh.pop %v199
    %vm203 = vcmask 25600
    %204 = vst.msk [vmem:[#allocation2] sm:$0x3] %vm203, %v202
    // Predicated region
    $region22: #{_actor_forward_small.1} parent=1 // pred_check
      _
    $region23: #{_actor_forward_small.1} parent=1 // pred_check_branch
      %206 = sbr.rel (0) target = $region25
    $region24: #{_actor_forward_small.1} parent=1 // pred_region
      %s208 = ssub.s32 32, 32
      %209 = vsyncadd [#allocation3], %s208
      %s211 = sshll.u32 [#allocation2], 4
      %s212 = int_to_ptr.vmem [resolvable:$true] %s211
      %214 = dma.vmem_to_hbm [thread:$0]  %s212, 32, %s5, [#allocation3]
    $region25: #{_actor_forward_small.1} parent=1 // pred_fallthru
      _
    // Predicated region
    $region26: #{_actor_forward_small.1} parent=1 // pred_check
      _
    $region27: #{_actor_forward_small.1} parent=1 // pred_check_branch
      %216 = sbr.rel (0) target = $region29
    $region28: #{_actor_forward_small.1} parent=1 // pred_region
      %217 = dma.done [#allocation3], 32
    $region29: #{_actor_forward_small.1} parent=1 // pred_fallthru
      _
    %218 = vsyncpa [#allocation3], 1

</llo_original>
